<compile_context>
chip_gen: v5e
topology: v5e:2x2
jax: 0.10.0
libtpu: 0.0.40
codegen_flags: <defaults>
</compile_context>

<pallas_src>
import functools

import jax
import jax.numpy as jnp
from jax.experimental import pallas as pl
from jax.experimental.pallas import tpu as pltpu

LANES = 128
SUBLANES = 8
TM_CAP = 2048      # rows per grid block (1 MiB f32 per input block)
CHUNK = 128        # rows per in-kernel accumulation chunk (16 f32 vregs)


def _row_align(*dtypes):
    """Row (sublane) alignment so (rows, 128) blocks tile natively for every
    input dtype: f32 -> 8, bf16/f16 -> 16, int8/bool -> 32."""
    a = SUBLANES
    for d in dtypes:
        a = max(a, 32 // jnp.dtype(d).itemsize)
    return a


def _bce_partial_kernel(o_ref, t_ref, part_ref, *, tm, chunk):
    """Reduce one (tm, 128) block of elementwise BCE terms to an (8, 128)
    f32 partial-sum slab (elementwise vreg adds only, no cross-lane work)."""

    def chunk_partial(o, t):
        o = o.astype(jnp.float32)
        t = t.astype(jnp.float32)
        # log1p(-o) == log(1 - o), accurate for o ~ 1.
        contrib = t * jnp.log(o) + (1.0 - t) * jnp.log1p(-o)
        rows = contrib.shape[0]
        return contrib.reshape(rows // SUBLANES, SUBLANES, LANES).sum(axis=0)

    if chunk == tm:
        # Single small chunk: reduce the whole block directly.
        part_ref[...] = chunk_partial(o_ref[...], t_ref[...])
    else:
        nchunks = tm // chunk

        def body(j, acc):
            r0 = pl.multiple_of(j * chunk, chunk)
            return acc + chunk_partial(o_ref[pl.ds(r0, chunk), :],
                                       t_ref[pl.ds(r0, chunk), :])

        part_ref[...] = jax.lax.fori_loop(
            0, nchunks, body, jnp.zeros((SUBLANES, LANES), jnp.float32),
            unroll=True)


def _bce_sum_plain(o, t):
    """Plain-JAX elementwise-BCE sum (only used for the small ragged tail)."""
    o = o.astype(jnp.float32)
    t = t.astype(jnp.float32)
    return jnp.sum(t * jnp.log(o) + (1.0 - t) * jnp.log1p(-o))


def cross_entropy_loss(outputs, targets):
    """Pallas equivalent of the PyTorch module's forward (elementwise BCE on
    probabilities, mean-reduced over all elements). Returns an f32 scalar."""
    assert outputs.shape == targets.shape
    total_n = outputs.size

    flat_o = outputs.reshape(-1)
    flat_t = targets.reshape(-1)

    align = _row_align(outputs.dtype, targets.dtype)
    n_rows = total_n // LANES

    # ---- fixed, shape-independent row-tile selection ----------------------
    if n_rows >= TM_CAP:
        tm, chunk = TM_CAP, CHUNK
    elif n_rows >= CHUNK:
        tm = (n_rows // CHUNK) * CHUNK          # one big block, multiple of 128
        chunk = CHUNK
    elif n_rows >= align:
        tm = (n_rows // align) * align          # tiny input: one small block
        chunk = tm
    else:
        tm = 0                                  # too small for the kernel

    bce_sum = jnp.float32(0.0)
    bulk_elems = 0

    if tm > 0:
        num_blocks = n_rows // tm
        bulk_rows = num_blocks * tm
        bulk_elems = bulk_rows * LANES

        if bulk_elems == total_n:
            # Common aligned case: pure bitcast reshape, no extra HBM traffic.
            o2 = flat_o.reshape(bulk_rows, LANES)
            t2 = flat_t.reshape(bulk_rows, LANES)
        else:
            # Unaligned total: slice off only the aligned bulk.  Unlike the
            # old pad+concatenate this never copies the tail and needs no
            # in-kernel masking / iota work.
            o2 = flat_o[:bulk_elems].reshape(bulk_rows, LANES)
            t2 = flat_t[:bulk_elems].reshape(bulk_rows, LANES)

        kernel = functools.partial(_bce_partial_kernel, tm=tm, chunk=chunk)

        partials = pl.pallas_call(
            kernel,
            out_shape=jax.ShapeDtypeStruct((num_blocks * SUBLANES, LANES),
                                           jnp.float32),
            grid_spec=pltpu.PrefetchScalarGridSpec(
                num_scalar_prefetch=0,
                grid=(num_blocks,),
                in_specs=[
                    pl.BlockSpec((tm, LANES), lambda i: (i, 0)),
                    pl.BlockSpec((tm, LANES), lambda i: (i, 0)),
                ],
                out_specs=pl.BlockSpec((SUBLANES, LANES), lambda i: (i, 0)),
            ),
            # NOTE: on v7x, pltpu.CORE_PARALLEL could shard these independent
            # blocks across both TensorCores; "parallel" is the portable
            # choice kept here.
            compiler_params=pltpu.CompilerParams(
                dimension_semantics=("parallel",),
            ),
        )(o2, t2)

        bce_sum = jnp.sum(partials)

    # Ragged tail (< one row tile + < 128 lane-tail elements): plain JAX.
    if bulk_elems < total_n:
        bce_sum = bce_sum + _bce_sum_plain(flat_o[bulk_elems:],
                                           flat_t[bulk_elems:])

    return -(bce_sum / jnp.float32(total_n))


def _reference(outputs, targets):
    o = outputs.astype(jnp.float32)
    t = targets.astype(jnp.float32)
    return -jnp.mean(t * jnp.log(o) + (1.0 - t) * jnp.log(1.0 - o))


if __name__ == "__main__":
    key = jax.random.PRNGKey(0)

    checks = [
        (2, 4, 16, 16),     # primary: batch=2, channels=4, spatial=16x16
        (3, 5, 7, 11),      # awkward element count: ragged-tail path
        (1, 8, 128, 128),   # exercises the chunked fori_loop path
        (1, 1, 5000, 128),  # multi-block grid + row-tail path
    ]

    for shape in checks:
        key, k1, k2 = jax.random.split(key, 3)
        # outputs must lie strictly in (0, 1) for the logs to be finite
        outputs = jax.random.uniform(k1, shape, dtype=jnp.float32,
                                     minval=0.05, maxval=0.95)
        targets = (jax.random.uniform(k2, shape) > 0.5).astype(jnp.float32)

        loss = jax.block_until_ready(cross_entropy_loss(outputs, targets))
        ref = jax.block_until_ready(_reference(outputs, targets))
        assert jnp.allclose(loss, ref, rtol=5e-4, atol=1e-5), (
            shape, float(loss), float(ref))

    print("KERNEL_OK")
</pallas_src>

<mosaic_0001>
module attributes {stable_mosaic.version = 11 : i64} {
  func.func @_bce_partial_kernel(%arg0: i32, %arg1: memref<16x128xf32, #tpu.memory_space<vmem>>, %arg2: memref<16x128xf32, #tpu.memory_space<vmem>>, %arg3: memref<8x128xf32, #tpu.memory_space<vmem>>) attributes {dimension_semantics = [#tpu.dimension_semantics<parallel>], iteration_bounds = array<i64: 1>, scalar_prefetch = 0 : i64, scratch_operands = 0 : i64, tpu.core_type = #tpu.core_type<tc>, window_params = [{transform_indices = @transform_0, window_bounds = array<i64: 16, 128>}, {transform_indices = @transform_1, window_bounds = array<i64: 16, 128>}, {transform_indices = @transform_2, window_bounds = array<i64: 8, 128>}]} {
    %c0 = arith.constant 0 : index
    %c0_0 = arith.constant 0 : index
    %0 = vector.load %arg1[%c0, %c0_0] : memref<16x128xf32, #tpu.memory_space<vmem>>, vector<16x128xf32>
    %c0_1 = arith.constant 0 : index
    %c0_2 = arith.constant 0 : index
    %1 = vector.load %arg2[%c0_1, %c0_2] : memref<16x128xf32, #tpu.memory_space<vmem>>, vector<16x128xf32>
    %2 = math.log %0 : vector<16x128xf32>
    %3 = arith.mulf %1, %2 : vector<16x128xf32>
    %cst = arith.constant 1.000000e+00 : f32
    %4 = vector.broadcast %cst : f32 to vector<16x128xf32>
    %5 = arith.subf %4, %1 : vector<16x128xf32>
    %cst_3 = arith.constant 0.000000e+00 : f32
    %6 = vector.broadcast %cst_3 : f32 to vector<16x128xf32>
    %7 = arith.subf %6, %0 : vector<16x128xf32>
    %8 = math.log1p %7 : vector<16x128xf32>
    %9 = arith.mulf %5, %8 : vector<16x128xf32>
    %10 = arith.addf %3, %9 : vector<16x128xf32>
    %11 = vector.shape_cast %10 : vector<16x128xf32> to vector<2x8x128xf32>
    %cst_4 = arith.constant dense<0.000000e+00> : vector<8x128xf32>
    %12 = vector.multi_reduction <add>, %11, %cst_4 [0] : vector<2x8x128xf32> to vector<8x128xf32>
    %c0_5 = arith.constant 0 : index
    %c0_6 = arith.constant 0 : index
    %13 = vector.load %arg3[%c0_5, %c0_6] : memref<8x128xf32, #tpu.memory_space<vmem>>, vector<8x128xf32>
    tpu.vector_store %arg3[%c0_5, %c0_6], %12 {strides = array<i32>} : memref<8x128xf32, #tpu.memory_space<vmem>>, vector<8x128xf32>,
    return
  }
  func.func @transform_0(%arg0: i32) -> (i32, i32) {
    %c0_i32 = arith.constant 0 : i32
    %c0_i32_0 = arith.constant 0 : i32
    return %arg0, %c0_i32 : i32, i32
  }
  func.func @transform_1(%arg0: i32) -> (i32, i32) {
    %c0_i32 = arith.constant 0 : i32
    %c0_i32_0 = arith.constant 0 : i32
    return %arg0, %c0_i32 : i32, i32
  }
  func.func @transform_2(%arg0: i32) -> (i32, i32) {
    %c0_i32 = arith.constant 0 : i32
    %c0_i32_0 = arith.constant 0 : i32
    return %arg0, %c0_i32 : i32, i32
  }
}

</mosaic_0001>

<llo_original>
// kernel: tpu_custom_call.1
$region0: #{tpu_custom_call.1}
  #allocation0 [shape = 'u32[]', space=smem, size = 0x4, offset = 0x4, fixed_abs, tag = 'smem constant byte address 0x4 - core index']
  #allocation1 [shape = 'u32[72,128]{1,0:T(1,128)}', space=vmem, size = 0x9000, scoped, tag = 'internal scratch']
  %s0 = inlined_call_operand.hbm [shape: f32[16,128], index: 0, kind: input, shape index: {}]
  %s1 = inlined_call_operand.hbm [shape: f32[16,128], index: 1, kind: input, shape index: {}]
  %s2 = inlined_call_operand.hbm [shape: f32[8,128], index: 2, kind: output, shape index: {}]
  %s3 = sld [smem:[#allocation0]]
  $region26: #{tpu_custom_call.1} parent=0
    _
  %s5 = ssub.s32 1, %s3
  %s6 = scalar_select 0, %s5, %s3
  $region1: #{tpu_custom_call.1} parent=0
    #allocation2 [shape = 'u8[8192]{0}', space=vmem, size = 0x2000, scoped, tag = 'input window, operand 0, single buffered']
    #allocation3 [shape = 's32[1]{0}', space=sflag, size = 0x4, scoped, tag = 'scoped memory for tpu_custom_call.1']
    #allocation4 [shape = 's32[1]{0}', space=sflag, size = 0x4, scoped, tag = 'scoped memory for tpu_custom_call.1']
    #allocation5 [shape = 'u8[8192]{0}', space=vmem, size = 0x2000, scoped, tag = 'input window, operand 1, single buffered']
    #allocation6 [shape = 's32[1]{0}', space=sflag, size = 0x4, scoped, tag = 'scoped memory for tpu_custom_call.1']
    #allocation7 [shape = 'u8[4096]{0}', space=vmem, size = 0x1000, scoped, tag = 'output window, operand 0, single buffered']
    %7 = vsyncpa [#allocation3], 0
    %8 = vsyncpa [#allocation6], 0
    %9 = vsyncpa [#allocation4], 0
    // Predicated region
    $region2: #{tpu_custom_call.1} parent=1 // pred_check
      _
    $region3: #{tpu_custom_call.1} parent=1 // pred_check_branch
      %11 = sbr.rel (0) target = $region5
    $region4: #{tpu_custom_call.1} parent=1 // pred_region
      %13 = vsyncadd [#allocation3], 0
      %s14 = sshll.u32 %s0, 4
      %s15 = int_to_ptr.hbm [resolvable:$true] %s14
      %s16 = sshll.u32 [#allocation2], 4
      %s17 = int_to_ptr.vmem [resolvable:$true] %s16
      %22 = dma.hbm_to_vmem [thread:$0]  %s15, 256, %s17, [#allocation3], 128, 128, 8
    $region5: #{tpu_custom_call.1} parent=1 // pred_fallthru
      _
    // Predicated region
    $region6: #{tpu_custom_call.1} parent=1 // pred_check
      _
    $region7: #{tpu_custom_call.1} parent=1 // pred_check_branch
      %24 = sbr.rel (0) target = $region9
    $region8: #{tpu_custom_call.1} parent=1 // pred_region
      %26 = vsyncadd [#allocation6], 0
      %s27 = sshll.u32 %s1, 4
      %s28 = int_to_ptr.hbm [resolvable:$true] %s27
      %s29 = sshll.u32 [#allocation5], 4
      %s30 = int_to_ptr.vmem [resolvable:$true] %s29
      %35 = dma.hbm_to_vmem [thread:$0]  %s28, 256, %s30, [#allocation6], 128, 128, 8
    $region9: #{tpu_custom_call.1} parent=1 // pred_fallthru
      _
    // Predicated region
    $region10: #{tpu_custom_call.1} parent=1 // pred_check
      _
    $region11: #{tpu_custom_call.1} parent=1 // pred_check_branch
      %37 = sbr.rel (0) target = $region13
    $region12: #{tpu_custom_call.1} parent=1 // pred_region
      %39 = dma.done [#allocation3], 256
    $region13: #{tpu_custom_call.1} parent=1 // pred_fallthru
      _
    // Predicated region
    $region14: #{tpu_custom_call.1} parent=1 // pred_check
      _
    $region15: #{tpu_custom_call.1} parent=1 // pred_check_branch
      %41 = sbr.rel (0) target = $region17
    $region16: #{tpu_custom_call.1} parent=1 // pred_region
      %43 = dma.done [#allocation6], 256
    $region17: #{tpu_custom_call.1} parent=1 // pred_fallthru
      _
    %v44 = vld [vmem:[#allocation2] sm:$0xff]
    %v45 = vld [vmem:[#allocation2 + $0x8] sm:$0xff]
    %v46 = vld [vmem:[#allocation5] sm:$0xff]
    %v47 = vld [vmem:[#allocation5 + $0x8] sm:$0xff]
    %v48 = vlog2.pop %v44
    %v49 = vmul.f32 %v48, 0.6931472
    %v50 = vlog2.pop %v45
    %v51 = vmul.f32 %v50, 0.6931472
    %v52 = vmul.f32 %v46, %v49
    %v53 = vmul.f32 %v47, %v51
    %v54 = vsub.f32 1.0, %v46
    %v55 = vsub.f32 1.0, %v47
    %v56 = vsub.f32 0.0, %v44
    %v57 = vsub.f32 0.0, %v45
    %v58 = vadd.f32 %v56, 1.0
    %v59 = vlog2.pop %v58
    %v60 = vmul.f32 %v59, 0.6931472
    %v61 = vmul.f32 -0.5, %v56
    %v62 = vadd.f32 %v61, 1.0
    %v63 = vmul.f32 %v62, %v56
    %v64 = vand.u32 2147483647, %v56
    %vm65 = vcmp.lt.f32.partialorder %v64, 0.0004427343
    %v66 = vsel %vm65, %v63, %v60
    %v67 = vadd.f32 %v57, 1.0
    %v68 = vlog2.pop %v67
    %v69 = vmul.f32 %v68, 0.6931472
    %v70 = vmul.f32 -0.5, %v57
    %v71 = vadd.f32 %v70, 1.0
    %v72 = vmul.f32 %v71, %v57
    %v73 = vand.u32 2147483647, %v57
    %vm74 = vcmp.lt.f32.partialorder %v73, 0.0004427343
    %v75 = vsel %vm74, %v72, %v69
    %v76 = vmul.f32 %v54, %v66
    %v77 = vmul.f32 %v55, %v75
    %v78 = vadd.f32 %v52, %v76
    %v79 = vadd.f32 %v53, %v77
    %v80 = vadd.f32 %v78, %v79
    %81 = vst [vmem:[#allocation7] sm:$0xff] %v80
    // Predicated region
    $region18: #{tpu_custom_call.1} parent=1 // pred_check
      _
    $region19: #{tpu_custom_call.1} parent=1 // pred_check_branch
      %83 = sbr.rel (0) target = $region21
    $region20: #{tpu_custom_call.1} parent=1 // pred_region
      %85 = vsyncadd [#allocation4], 0
      %s87 = sshll.u32 [#allocation7], 4
      %s88 = int_to_ptr.vmem [resolvable:$true] %s87
      %s89 = sshll.u32 %s2, 4
      %s90 = int_to_ptr.hbm [resolvable:$true] %s89
      %92 = dma.vmem_to_hbm [thread:$0]  %s88, 128, %s90, [#allocation4]
    $region21: #{tpu_custom_call.1} parent=1 // pred_fallthru
      _
    // Predicated region
    $region22: #{tpu_custom_call.1} parent=1 // pred_check
      _
    $region23: #{tpu_custom_call.1} parent=1 // pred_check_branch
      %94 = sbr.rel (0) target = $region25
    $region24: #{tpu_custom_call.1} parent=1 // pred_region
      %96 = dma.done [#allocation4], 128
    $region25: #{tpu_custom_call.1} parent=1 // pred_fallthru
      _
    %97 = vsyncpa [#allocation3], 1
    %98 = vsyncpa [#allocation6], 1
    %99 = vsyncpa [#allocation4], 1

</llo_original>
